<compile_context>
chip_gen: v7x
topology: tpu7x:2x2x1
jax: 0.10.0
libtpu: 0.0.40
codegen_flags: <defaults>
</compile_context>

<pallas_src>
import jax
import jax.numpy as jnp
from jax import lax
from jax.experimental import pallas as pl
from jax.experimental.pallas import tpu as pltpu

KH = KW = 3
EPS = 1e-5  # BatchNorm2d default eps


def _conv_bias_stats_kernel(lhs_ref, w_ref, b_ref, y_ref, s1_ref, s2_ref):
    # lhs_ref: (1, K, TP)      im2col input tile (K = 9*Cin, TP = spatial tile)
    # w_ref:   (Cout, K)       reshaped conv weights
    # b_ref:   (Cout, 1)       conv bias
    # y_ref:   (1, Cout, TP)   conv output tile (pre-BN), lane-dense
    # s1_ref:  (1, 1, Cout, 1) per-tile sum   (for BN mean)
    # s2_ref:  (1, 1, Cout, 1) per-tile sum^2 (for BN var)
    y = jnp.dot(w_ref[...], lhs_ref[0], preferred_element_type=jnp.float32)
    y = y + b_ref[...]                                   # (Cout, TP) + (Cout, 1)
    y_ref[0] = y
    s1_ref[0, 0] = jnp.sum(y, axis=1, keepdims=True)     # (Cout, 1)
    s2_ref[0, 0] = jnp.sum(y * y, axis=1, keepdims=True)  # (Cout, 1)


def _bn_relu_kernel(y_ref, scale_ref, shift_ref, o_ref):
    # y_ref/o_ref: (1, Cout, TP); scale_ref/shift_ref: (Cout, 1)
    o_ref[0] = jnp.maximum(y_ref[0] * scale_ref[...] + shift_ref[...], 0.0)


def _pick_spatial_tile(hw, max_tile=2048):
    """Largest multiple of 128 (lane-dense) dividing hw, capped at max_tile.
    Falls back to the full extent (always a legal block shape)."""
    t = (min(hw, max_tile) // 128) * 128
    while t >= 128:
        if hw % t == 0:
            return t
        t -= 128
    return hw


def cbr2d_forward(x_nchw, w_oihw, conv_bias, gamma, beta):
    """x_nchw: (N, Cin, H, W). Returns (N, Cout, H, W), matching the PyTorch module."""
    N, Cin, H, W = x_nchw.shape
    Cout = w_oihw.shape[0]
    HW = H * W
    K = KH * KW * Cin

    x = x_nchw.astype(jnp.float32)

    # --- im2col in the wrapper (layout plumbing, keeps the kernel a single matmul)
    # LHS[n, cin*9 + kh*3 + kw, h*W + w] = x_pad[n, cin, h+kh, w+kw]
    # which matches w_oihw.reshape(Cout, Cin*9).
    x_pad = jnp.pad(x, ((0, 0), (0, 0), (1, 1), (1, 1)))
    taps = [x_pad[:, :, kh:kh + H, kw:kw + W] for kh in range(KH) for kw in range(KW)]
    lhs = jnp.stack(taps, axis=2).reshape(N, K, HW)

    w2 = w_oihw.reshape(Cout, K).astype(jnp.float32)     # (Cout, 9*Cin)
    b2 = conv_bias.reshape(Cout, 1).astype(jnp.float32)  # (Cout, 1)

    TP = _pick_spatial_tile(HW)
    T = HW // TP

    # --- Pass 1: conv + bias + per-tile BN partial statistics (fused) ----------
    conv_y, part_sum, part_sq = pl.pallas_call(
        _conv_bias_stats_kernel,
        out_shape=(
            jax.ShapeDtypeStruct((N, Cout, HW), jnp.float32),
            jax.ShapeDtypeStruct((N, T, Cout, 1), jnp.float32),
            jax.ShapeDtypeStruct((N, T, Cout, 1), jnp.float32),
        ),
        grid_spec=pltpu.PrefetchScalarGridSpec(
            num_scalar_prefetch=0,
            grid=(N, T),
            in_specs=[
                pl.BlockSpec((1, K, TP), lambda n, t: (n, 0, t)),
                pl.BlockSpec((Cout, K), lambda n, t: (0, 0)),
                pl.BlockSpec((Cout, 1), lambda n, t: (0, 0)),
            ],
            out_specs=(
                pl.BlockSpec((1, Cout, TP), lambda n, t: (n, 0, t)),
                pl.BlockSpec((1, 1, Cout, 1), lambda n, t: (n, t, 0, 0)),
                pl.BlockSpec((1, 1, Cout, 1), lambda n, t: (n, t, 0, 0)),
            ),
        ),
        compiler_params=pltpu.CompilerParams(
            dimension_semantics=("parallel", "parallel")),
    )(lhs, w2, b2)

    # --- Finalize BN statistics (tiny (Cout,)-sized math, plain JAX) -----------
    count = jnp.float32(N * HW)
    s1 = jnp.sum(part_sum, axis=(0, 1))                  # (Cout, 1)
    s2 = jnp.sum(part_sq, axis=(0, 1))                   # (Cout, 1)
    mean = s1 / count
    var = jnp.maximum(s2 / count - mean * mean, 0.0)     # biased (train-mode) variance
    scale = gamma.reshape(Cout, 1).astype(jnp.float32) * lax.rsqrt(var + EPS)
    shift = beta.reshape(Cout, 1).astype(jnp.float32) - mean * scale

    # --- Pass 2: tiled, pipelined normalize (folded scale/shift) + ReLU --------
    out = pl.pallas_call(
        _bn_relu_kernel,
        out_shape=jax.ShapeDtypeStruct((N, Cout, HW), jnp.float32),
        grid_spec=pltpu.PrefetchScalarGridSpec(
            num_scalar_prefetch=0,
            grid=(N, T),
            in_specs=[
                pl.BlockSpec((1, Cout, TP), lambda n, t: (n, 0, t)),
                pl.BlockSpec((Cout, 1), lambda n, t: (0, 0)),
                pl.BlockSpec((Cout, 1), lambda n, t: (0, 0)),
            ],
            out_specs=pl.BlockSpec((1, Cout, TP), lambda n, t: (n, 0, t)),
        ),
        compiler_params=pltpu.CompilerParams(
            dimension_semantics=("parallel", "parallel")),
    )(conv_y, scale, shift)

    # Already in NCHW memory order: (N, Cout, H*W) -> (N, Cout, H, W) is free.
    return out.reshape(N, Cout, H, W)


def _reference(x_nchw, w_oihw, conv_bias, gamma, beta):
    """Pure-JAX reference of the PyTorch forward (train-mode BN)."""
    y = lax.conv_general_dilated(
        x_nchw, w_oihw, window_strides=(1, 1), padding=((1, 1), (1, 1)),
        dimension_numbers=("NCHW", "OIHW", "NCHW"))
    y = y + conv_bias[None, :, None, None]
    mean = jnp.mean(y, axis=(0, 2, 3), keepdims=True)
    var = jnp.mean(jnp.square(y - mean), axis=(0, 2, 3), keepdims=True)
    y = (y - mean) * lax.rsqrt(var + EPS)
    y = y * gamma[None, :, None, None] + beta[None, :, None, None]
    return jnp.maximum(y, 0.0)


if __name__ == "__main__":
    key = jax.random.PRNGKey(0)
    k_x, k_w, k_b = jax.random.split(key, 3)

    N, Cin, Cout, H, W = 2, 4, 8, 16, 16

    x = jax.random.normal(k_x, (N, Cin, H, W), dtype=jnp.float32)

    # Deterministic parameter init (shapes from CBR2d.__init__).
    fan_in = Cin * KH * KW
    bound = 1.0 / (fan_in ** 0.5)
    w_conv = jax.random.uniform(k_w, (Cout, Cin, KH, KW), jnp.float32, -bound, bound)
    b_conv = jax.random.uniform(k_b, (Cout,), jnp.float32, -bound, bound)
    gamma = jnp.ones((Cout,), jnp.float32)   # BatchNorm2d default weight init
    beta = jnp.zeros((Cout,), jnp.float32)   # BatchNorm2d default bias init

    out = cbr2d_forward(x, w_conv, b_conv, gamma, beta)
    out = jax.block_until_ready(out)

    ref = jax.block_until_ready(_reference(x, w_conv, b_conv, gamma, beta))
    assert out.shape == (N, Cout, H, W)
    assert jnp.allclose(out, ref, atol=1e-4, rtol=1e-4), "mismatch vs reference"

    print("KERNEL_OK")
</pallas_src>

<mosaic_0001>
module attributes {stable_mosaic.version = 11 : i64} {
  func.func @_conv_bias_stats_kernel(%arg0: i32, %arg1: i32, %arg2: memref<1x36x256xf32, #tpu.memory_space<vmem>>, %arg3: memref<8x36xf32, #tpu.memory_space<vmem>>, %arg4: memref<8x1xf32, #tpu.memory_space<vmem>>, %arg5: memref<1x8x256xf32, #tpu.memory_space<vmem>>, %arg6: memref<1x1x8x1xf32, #tpu.memory_space<vmem>>, %arg7: memref<1x1x8x1xf32, #tpu.memory_space<vmem>>) attributes {dimension_semantics = [#tpu.dimension_semantics<parallel>, #tpu.dimension_semantics<parallel>], iteration_bounds = array<i64: 2, 1>, scalar_prefetch = 0 : i64, scratch_operands = 0 : i64, tpu.core_type = #tpu.core_type<tc>, window_params = [{transform_indices = @transform_0, window_bounds = array<i64: 1, 36, 256>}, {pipeline_mode = #tpu.pipeline_mode<synchronous>, transform_indices = @transform_1, window_bounds = array<i64: 8, 36>}, {pipeline_mode = #tpu.pipeline_mode<synchronous>, transform_indices = @transform_2, window_bounds = array<i64: 8, 1>}, {transform_indices = @transform_3, window_bounds = array<i64: 1, 8, 256>}, {transform_indices = @transform_4, window_bounds = array<i64: 1, 1, 8, 1>}, {transform_indices = @transform_5, window_bounds = array<i64: 1, 1, 8, 1>}]} {
    %c0 = arith.constant 0 : index
    %c0_0 = arith.constant 0 : index
    %0 = vector.load %arg3[%c0, %c0_0] : memref<8x36xf32, #tpu.memory_space<vmem>>, vector<8x36xf32>
    %c0_1 = arith.constant 0 : index
    %c0_2 = arith.constant 0 : index
    %c0_3 = arith.constant 0 : index
    %1 = vector.load %arg2[%c0_1, %c0_2, %c0_3] : memref<1x36x256xf32, #tpu.memory_space<vmem>>, vector<1x36x256xf32>
    %2 = vector.shape_cast %1 : vector<1x36x256xf32> to vector<36x256xf32>
    %cst = arith.constant dense<0.000000e+00> : vector<8x256xf32>
    %3 = tpu.matmul %0, %2, %cst {dimension_numbers = #tpu.dot_dimension_numbers<[1], [0], [0], [1], [0, 0, 1, 1], [], []>} : vector<8x36xf32>, vector<36x256xf32>, vector<8x256xf32> -> vector<8x256xf32>
    %c0_4 = arith.constant 0 : index
    %c0_5 = arith.constant 0 : index
    %4 = vector.load %arg4[%c0_4, %c0_5] : memref<8x1xf32, #tpu.memory_space<vmem>>, vector<8x1xf32>
    %5 = vector.broadcast %4 : vector<8x1xf32> to vector<8x256xf32>
    %6 = arith.addf %3, %5 : vector<8x256xf32>
    %c0_6 = arith.constant 0 : index
    %c0_7 = arith.constant 0 : index
    %c0_8 = arith.constant 0 : index
    %7 = vector.load %arg5[%c0_6, %c0_7, %c0_8] : memref<1x8x256xf32, #tpu.memory_space<vmem>>, vector<1x8x256xf32>
    %8 = vector.shape_cast %7 : vector<1x8x256xf32> to vector<8x256xf32>
    %9 = vector.shape_cast %6 : vector<8x256xf32> to vector<1x8x256xf32>
    tpu.vector_store %arg5[%c0_6, %c0_7, %c0_8], %9 {strides = array<i32>} : memref<1x8x256xf32, #tpu.memory_space<vmem>>, vector<1x8x256xf32>,
    %cst_9 = arith.constant dense<0.000000e+00> : vector<8xf32>
    %10 = vector.multi_reduction <add>, %6, %cst_9 [1] : vector<8x256xf32> to vector<8xf32>
    %11 = vector.shape_cast %10 : vector<8xf32> to vector<8x1xf32>
    %c0_10 = arith.constant 0 : index
    %c0_11 = arith.constant 0 : index
    %c0_12 = arith.constant 0 : index
    %c0_13 = arith.constant 0 : index
    %12 = vector.load %arg6[%c0_10, %c0_11, %c0_12, %c0_13] : memref<1x1x8x1xf32, #tpu.memory_space<vmem>>, vector<1x1x8x1xf32>
    %13 = vector.shape_cast %12 : vector<1x1x8x1xf32> to vector<8x1xf32>
    %14 = vector.shape_cast %11 : vector<8x1xf32> to vector<1x1x8x1xf32>
    tpu.vector_store %arg6[%c0_10, %c0_11, %c0_12, %c0_13], %14 {strides = array<i32>} : memref<1x1x8x1xf32, #tpu.memory_space<vmem>>, vector<1x1x8x1xf32>,
    %15 = arith.mulf %6, %6 : vector<8x256xf32>
    %cst_14 = arith.constant dense<0.000000e+00> : vector<8xf32>
    %16 = vector.multi_reduction <add>, %15, %cst_14 [1] : vector<8x256xf32> to vector<8xf32>
    %17 = vector.shape_cast %16 : vector<8xf32> to vector<8x1xf32>
    %c0_15 = arith.constant 0 : index
    %c0_16 = arith.constant 0 : index
    %c0_17 = arith.constant 0 : index
    %c0_18 = arith.constant 0 : index
    %18 = vector.load %arg7[%c0_15, %c0_16, %c0_17, %c0_18] : memref<1x1x8x1xf32, #tpu.memory_space<vmem>>, vector<1x1x8x1xf32>
    %19 = vector.shape_cast %18 : vector<1x1x8x1xf32> to vector<8x1xf32>
    %20 = vector.shape_cast %17 : vector<8x1xf32> to vector<1x1x8x1xf32>
    tpu.vector_store %arg7[%c0_15, %c0_16, %c0_17, %c0_18], %20 {strides = array<i32>} : memref<1x1x8x1xf32, #tpu.memory_space<vmem>>, vector<1x1x8x1xf32>,
    return
  }
  func.func @transform_0(%arg0: i32, %arg1: i32) -> (i32, i32, i32) {
    %c0_i32 = arith.constant 0 : i32
    %c0_i32_0 = arith.constant 0 : i32
    return %arg0, %c0_i32, %arg1 : i32, i32, i32
  }
  func.func @transform_1(%arg0: i32, %arg1: i32) -> (i32, i32) {
    %c0_i32 = arith.constant 0 : i32
    %c0_i32_0 = arith.constant 0 : i32
    %c0_i32_1 = arith.constant 0 : i32
    return %c0_i32, %c0_i32_0 : i32, i32
  }
  func.func @transform_2(%arg0: i32, %arg1: i32) -> (i32, i32) {
    %c0_i32 = arith.constant 0 : i32
    %c0_i32_0 = arith.constant 0 : i32
    %c0_i32_1 = arith.constant 0 : i32
    return %c0_i32, %c0_i32_0 : i32, i32
  }
  func.func @transform_3(%arg0: i32, %arg1: i32) -> (i32, i32, i32) {
    %c0_i32 = arith.constant 0 : i32
    %c0_i32_0 = arith.constant 0 : i32
    return %arg0, %c0_i32, %arg1 : i32, i32, i32
  }
  func.func @transform_4(%arg0: i32, %arg1: i32) -> (i32, i32, i32, i32) {
    %c0_i32 = arith.constant 0 : i32
    %c0_i32_0 = arith.constant 0 : i32
    %c0_i32_1 = arith.constant 0 : i32
    return %arg0, %arg1, %c0_i32, %c0_i32_0 : i32, i32, i32, i32
  }
  func.func @transform_5(%arg0: i32, %arg1: i32) -> (i32, i32, i32, i32) {
    %c0_i32 = arith.constant 0 : i32
    %c0_i32_0 = arith.constant 0 : i32
    %c0_i32_1 = arith.constant 0 : i32
    return %arg0, %arg1, %c0_i32, %c0_i32_0 : i32, i32, i32, i32
  }
}

</mosaic_0001>

<llo_original>
// kernel: tpu_custom_call.1
$region0: #{tpu_custom_call.1}
  #allocation0 [shape = 'u32[]', space=smem, size = 0x4, offset = 0x4, fixed_abs, tag = 'smem constant byte address 0x4 - core index']
  #allocation1 [shape = 'u32[144,128]{1,0:T(1,128)}', space=vmem, size = 0x12000, scoped, tag = 'internal scratch']
  %s0 = inlined_call_operand.vmem [shape: f32[2,36,256], index: 0, kind: input, shape index: {}]
  %s1 = inlined_call_operand.vmem [shape: f32[8,36], index: 1, kind: input, shape index: {}]
  %s2 = inlined_call_operand.vmem [shape: f32[8,1], index: 2, kind: input, shape index: {}]
  %s3 = inlined_call_operand.hbm [shape: f32[2,8,256], index: 3, kind: output, shape index: {0}]
  %s4 = inlined_call_operand.vmem [shape: f32[2,1,8,1], index: 4, kind: output, shape index: {1}]
  %s5 = inlined_call_operand.vmem [shape: f32[2,1,8,1], index: 5, kind: output, shape index: {2}]
  %6 = xla_tuple %s3, %s4, %s5
  %s7 = sld [smem:[#allocation0]]
  $region61: #{tpu_custom_call.1} parent=0
    _
  %s9 = ssub.s32 1, %s7
  %s10 = scalar_select 0, %s9, %s7
  $region1: #{tpu_custom_call.1} parent=0
    #allocation2 [shape = 'u8[16384]{0}', space=vmem, size = 0x4000, scoped, tag = 'output window, operand 0']
    #allocation3 [shape = 's32[2]{0}', space=sflag, size = 0x8, scoped, tag = 'scoped memory for tpu_custom_call.1']
    %11 = vsyncpa [#allocation3], 0
    %s12 = scalar_lea.sflag [#allocation3], 1
    %13 = vsyncpa %s12, 0
    loop: start=0, step=1, limit=4
    $region2: #{tpu_custom_call.1} parent=1 // loop_pre_header
      _
    $region3: #{tpu_custom_call.1} parent=1 // loop_header
      %s15 = sphi 0, %s19
      %p16 = scmp.ge.s32.totalorder %s15, 4
      %s22 = sphi 0, %s34
      %s23 = sphi 0, %s30
      %s24 = sphi 0, %s22
      %s25 = sphi 0, %s23
      %s26 = sphi 0, %s24
      %s27 = sphi 0, %s25
      %s39 = sphi 0, %s41
      %s42 = sphi 0, %s39
      %s43 = sphi 0, %s42
      %s59 = sphi 0, %s43
      %s63 = sphi 0, %s63
      %s65 = sphi 0, %s63
      %s66 = sphi 0, %s65
      %s80 = sphi 0, %s66
      %s84 = sphi 0, %s84
      %s86 = sphi 0, %s84
      %s87 = sphi 0, %s86
      %s101 = sphi 0, %s87
      %s109 = sphi 0, %s111
      %s112 = sphi 0, %s109
      %s113 = sphi 0, %s112
      %s129 = sphi 0, %s113
      %s137 = sphi 0, %s139
      %s140 = sphi 0, %s137
      %s141 = sphi 0, %s140
      %s157 = sphi 0, %s141
      %s165 = sphi 0, %s167
      %s168 = sphi 0, %s165
      %s169 = sphi 0, %s168
      %s185 = sphi 0, %s169
    $region4: #{tpu_custom_call.1} parent=1 // loop_header_branch
      %18 = sbr.rel (%p16) target = $region8
    $region5: #{tpu_custom_call.1} parent=1 // loop_body
      %s20 = ssub.s32 %s15, 1
      %s21 = ssub.s32 %s15, 2
      %s28 = sadd.s32 1, %s23
      %p29 = scmp.ge.s32.totalorder %s28, 1
      %s30 = scalar_select %p29, 0, %s28
      %s31 = sadd.s32 1, %s22
      %s32 = scalar_select %p29, %s31, %s22
      %p33 = scmp.ge.s32.totalorder %s32, 2
      %s34 = scalar_select %p33, 0, %s32
      %s35 = ssub.s32 %s22, %s34
      %s36 = ssub.s32 %s23, %s30
      %s37 = sor.u32 %s35, %s36
      %p38 = scmp.eq.s32.totalorder %s37, 0
      %s40 = sadd.s32 %s39, 1
      %s41 = scalar_select %p38, %s39, %s40
      %p44 = pneg %p38
      %p45 = scmp.eq.s32.totalorder %s15, 1
      %p46 = por %p44, %p45
      %p47 = scmp.ne.s32.totalorder %s39, %s42
      %p48 = scmp.eq.s32.totalorder %s15, 0
      %p49 = por %p47, %p48
      %p50 = scmp.ne.s32.totalorder %s39, %s42
      %p51 = scmp.eq.s32.totalorder %s20, 1
      %p52 = por %p50, %p51
      %p53 = scmp.ne.s32.totalorder %s42, %s43
      %p54 = scmp.eq.s32.totalorder %s20, 0
      %p55 = por %p53, %p54
      %p56 = scmp.ne.s32.totalorder %s42, %s43
      %p57 = scmp.eq.s32.totalorder %s21, 1
      %p58 = por %p56, %p57
      %p60 = scmp.ne.s32.totalorder %s43, %s59
      %p61 = scmp.eq.s32.totalorder %s21, 0
      %p62 = por %p60, %p61
      %s64 = sadd.s32 %s63, 1
      %p67 = scmp.eq.s32.totalorder %s15, 1
      %p68 = scmp.ne.s32.totalorder %s63, %s65
      %p69 = scmp.eq.s32.totalorder %s15, 0
      %p70 = por %p68, %p69
      %p71 = scmp.ne.s32.totalorder %s63, %s65
      %p72 = scmp.eq.s32.totalorder %s20, 1
      %p73 = por %p71, %p72
      %p74 = scmp.ne.s32.totalorder %s65, %s66
      %p75 = scmp.eq.s32.totalorder %s20, 0
      %p76 = por %p74, %p75
      %p77 = scmp.ne.s32.totalorder %s65, %s66
      %p78 = scmp.eq.s32.totalorder %s21, 1
      %p79 = por %p77, %p78
      %p81 = scmp.ne.s32.totalorder %s66, %s80
      %p82 = scmp.eq.s32.totalorder %s21, 0
      %p83 = por %p81, %p82
      %s85 = sadd.s32 %s84, 1
      %p88 = scmp.eq.s32.totalorder %s15, 1
      %p89 = scmp.ne.s32.totalorder %s84, %s86
      %p90 = scmp.eq.s32.totalorder %s15, 0
      %p91 = por %p89, %p90
      %p92 = scmp.ne.s32.totalorder %s84, %s86
      %p93 = scmp.eq.s32.totalorder %s20, 1
      %p94 = por %p92, %p93
      %p95 = scmp.ne.s32.totalorder %s86, %s87
      %p96 = scmp.eq.s32.totalorder %s20, 0
      %p97 = por %p95, %p96
      %p98 = scmp.ne.s32.totalorder %s86, %s87
      %p99 = scmp.eq.s32.totalorder %s21, 1
      %p100 = por %p98, %p99
      %p102 = scmp.ne.s32.totalorder %s87, %s101
      %p103 = scmp.eq.s32.totalorder %s21, 0
      %p104 = por %p102, %p103
      %s105 = ssub.s32 %s22, %s34
      %s106 = ssub.s32 %s23, %s30
      %s107 = sor.u32 %s105, %s106
      %p108 = scmp.eq.s32.totalorder %s107, 0
      %s110 = sadd.s32 %s109, 1
      %s111 = scalar_select %p108, %s109, %s110
      %p114 = pneg %p108
      %p115 = scmp.eq.s32.totalorder %s15, 1
      %p116 = por %p114, %p115
      %p117 = scmp.ne.s32.totalorder %s109, %s112
      %p118 = scmp.eq.s32.totalorder %s15, 0
      %p119 = por %p117, %p118
      %p120 = scmp.ne.s32.totalorder %s109, %s112
      %p121 = scmp.eq.s32.totalorder %s20, 1
      %p122 = por %p120, %p121
      %p123 = scmp.ne.s32.totalorder %s112, %s113
      %p124 = scmp.eq.s32.totalorder %s20, 0
      %p125 = por %p123, %p124
      %p126 = scmp.ne.s32.totalorder %s112, %s113
      %p127 = scmp.eq.s32.totalorder %s21, 1
      %p128 = por %p126, %p127
      %p130 = scmp.ne.s32.totalorder %s113, %s129
      %p131 = scmp.eq.s32.totalorder %s21, 0
      %p132 = por %p130, %p131
      %s133 = ssub.s32 %s22, %s34
      %s134 = ssub.s32 %s23, %s30
      %s135 = sor.u32 %s133, %s134
      %p136 = scmp.eq.s32.totalorder %s135, 0
      %s138 = sadd.s32 %s137, 1
      %s139 = scalar_select %p136, %s137, %s138
      %p142 = pneg %p136
      %p143 = scmp.eq.s32.totalorder %s15, 1
      %p144 = por %p142, %p143
      %p145 = scmp.ne.s32.totalorder %s137, %s140
      %p146 = scmp.eq.s32.totalorder %s15, 0
      %p147 = por %p145, %p146
      %p148 = scmp.ne.s32.totalorder %s137, %s140
      %p149 = scmp.eq.s32.totalorder %s20, 1
      %p150 = por %p148, %p149
      %p151 = scmp.ne.s32.totalorder %s140, %s141
      %p152 = scmp.eq.s32.totalorder %s20, 0
      %p153 = por %p151, %p152
      %p154 = scmp.ne.s32.totalorder %s140, %s141
      %p155 = scmp.eq.s32.totalorder %s21, 1
      %p156 = por %p154, %p155
      %p158 = scmp.ne.s32.totalorder %s141, %s157
      %p159 = scmp.eq.s32.totalorder %s21, 0
      %p160 = por %p158, %p159
      %s161 = ssub.s32 %s22, %s34
      %s162 = ssub.s32 %s23, %s30
      %s163 = sor.u32 %s161, %s162
      %p164 = scmp.eq.s32.totalorder %s163, 0
      %s166 = sadd.s32 %s165, 1
      %s167 = scalar_select %p164, %s165, %s166
      %p170 = pneg %p164
      %p171 = scmp.eq.s32.totalorder %s15, 1
      %p172 = por %p170, %p171
      %p173 = scmp.ne.s32.totalorder %s165, %s168
      %p174 = scmp.eq.s32.totalorder %s15, 0
      %p175 = por %p173, %p174
      %p176 = scmp.ne.s32.totalorder %s165, %s168
      %p177 = scmp.eq.s32.totalorder %s20, 1
      %p178 = por %p176, %p177
      %p179 = scmp.ne.s32.totalorder %s168, %s169
      %p180 = scmp.eq.s32.totalorder %s20, 0
      %p181 = por %p179, %p180
      %p182 = scmp.ne.s32.totalorder %s168, %s169
      %p183 = scmp.eq.s32.totalorder %s21, 1
      %p184 = por %p182, %p183
      %p186 = scmp.ne.s32.totalorder %s169, %s185
      %p187 = scmp.eq.s32.totalorder %s21, 0
      %p188 = por %p186, %p187
      %p189 = scmp.le.s32.totalorder 1, %s15
      %p190 = scmp.lt.s32.totalorder %s15, 3
      %p191 = pnand %p189, %p190
      %p192 = pneg %p191
      // Predicated region
      $region9: #{tpu_custom_call.1} parent=5 // pred_check
        _
      $region10: #{tpu_custom_call.1} parent=5 // pred_check_branch
        %194 = sbr.rel (%p191) target = $region12
      $region11: #{tpu_custom_call.1} parent=5 // pred_region
        %s195 = ssub.s32 %s15, 1
        // Predicated region
        $region13: #{tpu_custom_call.1} parent=11 // pred_check
          %p196 = pneg %p76
        $region14: #{tpu_custom_call.1} parent=11 // pred_check_branch
          %198 = sbr.rel (%p196) target = $region16
        $region15: #{tpu_custom_call.1} parent=11 // pred_region
          _
        $region16: #{tpu_custom_call.1} parent=11 // pred_fallthru
          _
        // Predicated region
        $region17: #{tpu_custom_call.1} parent=11 // pred_check
          %p199 = pneg %p97
        $region18: #{tpu_custom_call.1} parent=11 // pred_check_branch
          %201 = sbr.rel (%p199) target = $region20
        $region19: #{tpu_custom_call.1} parent=11 // pred_region
          _
        $region20: #{tpu_custom_call.1} parent=11 // pred_fallthru
          _
      $region12: #{tpu_custom_call.1} parent=5 // pred_fallthru
        _
      %p202 = scmp.lt.s32.totalorder %s15, 2
      // Predicated region
      $region21: #{tpu_custom_call.1} parent=5 // pred_check
        %p203 = pneg %p202
      $region22: #{tpu_custom_call.1} parent=5 // pred_check_branch
        %205 = sbr.rel (%p203) target = $region24
      $region23: #{tpu_custom_call.1} parent=5 // pred_region
        // Predicated region
        $region25: #{tpu_custom_call.1} parent=23 // pred_check
          %p206 = pneg %p49
        $region26: #{tpu_custom_call.1} parent=23 // pred_check_branch
          %208 = sbr.rel (%p206) target = $region28
        $region27: #{tpu_custom_call.1} parent=23 // pred_region
          %s209 = smul.u32 2, %s23
          %p210 = scmp.lt.s32.totalorder %s22, 1
          %s211 = scalar_select %p210, %s22, 1
          %p212 = scmp.lt.s32.totalorder %s209, 1
          %s213 = scalar_select %p212, %s209, 1
          %s214 = smul.addr %s211, 10
          %s215 = sadd.s32 %s213, %s214
          %s216 = smul.addr %s215, 8
          %s217 = scalar_lea.vmem %s0, %s216
          %s218 = smul.u32 2, %s23
        $region28: #{tpu_custom_call.1} parent=23 // pred_fallthru
          _
      $region24: #{tpu_custom_call.1} parent=5 // pred_fallthru
        _
      %p219 = scmp.le.s32.totalorder 1, %s15
      %p220 = scmp.lt.s32.totalorder %s15, 3
      %p221 = pnand %p219, %p220
      %p222 = pneg %p221
      // Predicated region
      $region29: #{tpu_custom_call.1} parent=5 // pred_check
        _
      $region30: #{tpu_custom_call.1} parent=5 // pred_check_branch
        %224 = sbr.rel (%p221) target = $region32
      $region31: #{tpu_custom_call.1} parent=5 // pred_region
        %s225 = ssub.s32 %s15, 1
        %s226 = smul.u32 2, %s25
        %p227 = scmp.lt.s32.totalorder %s24, 1
        %s228 = scalar_select %p227, %s24, 1
        %p229 = scmp.lt.s32.totalorder %s226, 1
        %s230 = scalar_select %p229, %s226, 1
        %s231 = smul.addr %s228, 10
        %s232 = sadd.s32 %s230, %s231
        %s233 = smul.addr %s232, 8
        %s234 = scalar_lea.vmem %s0, %s233
        %p235 = pneg %p55
        %p236 = pneg %p52
        %p237 = pneg %p76
        %p238 = pneg %p73
        %p239 = pneg %p97
        %p240 = pneg %p94
        %p241 = pneg %p125
        %p242 = pneg %p122
        %s243 = sand.u32 %s112, 1
        %s244 = scalar_lea.sflag [#allocation3], %s243
        %s245 = sand.u32 %s112, 1
        %s246 = smul.addr %s245, 16
        %s247 = scalar_lea.vmem [#allocation2], %s246
        %p248 = pneg %p153
        %p249 = pneg %p150
        %p250 = scmp.lt.s32.totalorder %s24, 1
        %s251 = scalar_select %p250, %s24, 1
        %p252 = scmp.lt.s32.totalorder %s25, 0
        %s253 = scalar_select %p252, %s25, 0
        %s254 = sadd.s32 %s253, %s251
        %s255 = smul.addr %s254, 8
        %s256 = scalar_lea.vmem %s4, %s255
        %p257 = pneg %p181
        %p258 = pneg %p178
        %p259 = scmp.lt.s32.totalorder %s24, 1
        %s260 = scalar_select %p259, %s24, 1
        %p261 = scmp.lt.s32.totalorder %s25, 0
        %s262 = scalar_select %p261, %s25, 0
        %s263 = sadd.s32 %s262, %s260
        %s264 = smul.addr %s263, 8
        %s265 = scalar_lea.vmem %s5, %s264
        %s266 = smul.u32 2, %s25
        %p267 = scmp.lt.s32.totalorder %s24, 1
        %s268 = scalar_select %p267, %s24, 1
        %p269 = scmp.lt.s32.totalorder %s266, 1
        %s270 = scalar_select %p269, %s266, 1
        %s271 = smul.addr %s268, 10
        %s272 = sadd.s32 %s270, %s271
        %s273 = smul.addr %s272, 8
        %s274 = scalar_lea.vmem %s0, %s273
        %s275 = smul.u32 2, %s25
        %s276 = smul.u32 2, %s25
        %p277 = scmp.lt.s32.totalorder %s24, 1
        %s278 = scalar_select %p277, %s24, 1
        %p279 = scmp.lt.s32.totalorder %s25, 0
        %s280 = scalar_select %p279, %s25, 0
        %s281 = sadd.s32 %s280, %s278
        %s282 = smul.addr %s281, 8
        %s283 = scalar_lea.vmem %s4, %s282
        %p284 = scmp.lt.s32.totalorder %s24, 1
        %s285 = scalar_select %p284, %s24, 1
        %p286 = scmp.lt.s32.totalorder %s25, 0
        %s287 = scalar_select %p286, %s25, 0
        %s288 = sadd.s32 %s287, %s285
        %s289 = smul.addr %s288, 8
        %s290 = scalar_lea.vmem %s5, %s289
        %v291 = vld [vmem:[%s1] sm:$0xff]
        %v292 = vld [vmem:[%s274] sm:$0xff]
        %v293 = vld [vmem:[%s274 + $0x8] sm:$0xff]
        %v294 = vld [vmem:[%s274 + $0x10] sm:$0xff]
        %v295 = vld [vmem:[%s274 + $0x18] sm:$0xff]
        %v296 = vld [vmem:[%s274 + $0x20] sm:$0xff]
        %v297 = vld [vmem:[%s274 + $0x28] sm:$0xff]
        %v298 = vld [vmem:[%s274 + $0x30] sm:$0xff]
        %v299 = vld [vmem:[%s274 + $0x38] sm:$0xff]
        %v300 = vld [vmem:[%s274 + $0x40] sm:$0xf]
        %v301 = vld [vmem:[%s274 + $0x48] sm:$0xf]
        %v302 = vld [vmem:[%s2] sm:$0xff]
        %304 = vset.pattern.permute.xlu0 0
        %305 = vperm.xlu0 %304, %v302
        %v306 = vpop.permute.xlu0 %305
        %vm308 = vcmask 293888
        %v310 = vsel %vm308, %v291, 0
        %vm312 = vcmask 1043456
        %v314 = vsel %vm312, %v300, 0
        %v317 = vsel %vm312, %v301, 0
        %319 = vmatprep.subr.mxu0 %v293
        %320 = vmatpush1.msra.mxu0 %v292
        %321 = vmatprep.subr.mxu0 %v295
        %322 = vmatpush1.msra.mxu0 %v294
        %323 = vmatprep.subr.mxu0 %v297
        %324 = vmatpush1.msra.mxu0 %v296
        %325 = vmatprep.subr.mxu0 %v299
        %326 = vmatpush1.msra.mxu0 %v298
        %327 = vmatprep.subr.mxu0 %v317
        %328 = vmatpush1.msra.mxu0 %v314
        %329 = vmatprep.subr.mxu0 0.0
        %330 = vmatpush1.msra.mxu0 0.0
        %331 = vmatprep.subr.mxu0 0.0
        %332 = vmatpush1.msra.mxu0 0.0
        %333 = vmatprep.subr.mxu0 0.0
        %334 = vmatpush1.msra.mxu0 0.0
        %335 = vmatprep.subr.mxu0 0.0
        %336 = vmatpush1.msra.mxu0 0.0
        %337 = vmatprep.subr.mxu0 0.0
        %338 = vmatpush1.msra.mxu0 0.0
        %339 = vmatprep.subr.mxu0 0.0
        %340 = vmatpush1.msra.mxu0 0.0
        %341 = vmatprep.subr.mxu0 0.0
        %342 = vmatpush1.msra.mxu0 0.0
        %343 = vmatprep.subr.mxu0 0.0
        %344 = vmatpush1.msra.mxu0 0.0
        %345 = vmatprep.subr.mxu0 0.0
        %346 = vmatpush1.msra.mxu0 0.0
        %347 = vmatprep.subr.mxu0 0.0
        %348 = vmatpush1.msra.mxu0 0.0
        %349 = vmatprep.subr.mxu0 0.0
        %350 = vmatpush1.msra.mxu0 0.0
        %351 = vmatprep.subr.mxu0 0.0
        %352 = vmatpush1.msra.mxu0 0.0
        %353 = vmatprep.subr.mxu0 0.0
        %354 = vmatpush1.msra.mxu0 0.0
        %355 = vmatprep.subr.mxu0 0.0
        %356 = vmatpush1.msra.mxu0 0.0
        %357 = vmatprep.subr.mxu0 0.0
        %358 = vmatpush1.msra.mxu0 0.0
        %359 = vmatprep.subr.mxu0 0.0
        %360 = vmatpush1.msra.mxu0 0.0
        %361 = vmatprep.subr.mxu0 0.0
        %362 = vmatpush1.msra.mxu0 0.0
        %363 = vmatprep.subr.mxu0 0.0
        %364 = vmatpush1.msra.mxu0 0.0
        %365 = vmatprep.subr.mxu0 0.0
        %366 = vmatpush1.msra.mxu0 0.0
        %367 = vmatprep.subr.mxu0 0.0
        %368 = vmatpush1.msra.mxu0 0.0
        %369 = vmatprep.subr.mxu0 0.0
        %370 = vmatpush1.msra.mxu0 0.0
        %371 = vmatprep.subr.mxu0 0.0
        %372 = vmatpush1.msra.mxu0 0.0
        %373 = vmatprep.subr.mxu0 0.0
        %374 = vmatpush1.msra.mxu0 0.0
        %375 = vmatprep.subr.mxu0 0.0
        %376 = vmatpush1.msra.mxu0 0.0
        %377 = vmatprep.subr.mxu0 0.0
        %378 = vmatpush1.msra.mxu0 0.0
        %379 = vmatprep.subr.mxu0 0.0
        %380 = vmatpush1.msra.mxu0 0.0
        %381 = vmatprep.subr.mxu0 0.0
        %382 = vmatpush1.msra.mxu0 0.0
        %383 = vmatprep.mubr.f32.mxu0 0.0
        %384 = vmatmul.mubr.f32.gmra.mrb[0].mxu0 %v310
        %v385 = vpop.f32.mrb[0].mxu0
        %v386 = vadd.f32 %v306, %v385
        %v387 = vpop.f32.mrb[0].mxu0
        %v388 = vadd.f32 %v306, %v387
        %389 = vdwg.mxu0
        %390 = vst [vmem:[%s247] sm:$0xff] %v386
        %391 = vst [vmem:[%s247 + $0x8] sm:$0xff] %v388
        %v392 = vadd.f32 %v386, %v388
        %393 = vadd.xlane.f32.xlu0 %v392
        %v394 = vpop.xlane.xlu0 %393
        %vm395 = vcmask 7168
        %396 = vst.msk [vmem:[%s283] sm:$0xff] %vm395, %v394
        %v397 = vmul.f32 %v386, %v386
        %v398 = vmul.f32 %v388, %v388
        %v399 = vadd.f32 %v397, %v398
        %400 = vadd.xlane.f32.xlu0 %v399
        %v401 = vpop.xlane.xlu0 %400
        %402 = vst.msk [vmem:[%s290] sm:$0xff] %vm395, %v401
        %s403 = sand.u32 %s112, 1
        %s404 = scalar_lea.sflag [#allocation3], %s403
        %s405 = sand.u32 %s112, 1
        %s406 = smul.addr %s405, 16
        %s407 = scalar_lea.vmem [#allocation2], %s406
        %p408 = scmp.lt.s32.totalorder %s24, 1
        %s409 = scalar_select %p408, %s24, 1
        %p410 = scmp.lt.s32.totalorder %s25, 0
        %s411 = scalar_select %p410, %s25, 0
        %s412 = sadd.s32 %s411, %s409
        %s413 = smul.addr %s412, 8
        %s414 = scalar_lea.vmem %s4, %s413
        %p415 = scmp.lt.s32.totalorder %s24, 1
        %s416 = scalar_select %p415, %s24, 1
        %p417 = scmp.lt.s32.totalorder %s25, 0
        %s418 = scalar_select %p417, %s25, 0
        %s419 = sadd.s32 %s418, %s416
        %s420 = smul.addr %s419, 8
        %s421 = scalar_lea.vmem %s5, %s420
        // Predicated region
        $region33: #{tpu_custom_call.1} parent=31 // pred_check
          %p422 = pneg %p122
        $region34: #{tpu_custom_call.1} parent=31 // pred_check_branch
          %424 = sbr.rel (%p422) target = $region36
        $region35: #{tpu_custom_call.1} parent=31 // pred_region
          %s425 = smul.u32 2, %s25
          %s427 = ssub.s32 256, 256
          %428 = vsyncadd %s404, %s427
          %s429 = smul.addr %s24, 2
          %s430 = sadd.s32 %s425, %s429
          %s431 = smul.addr %s430, 128
          %s432 = scalar_lea.hbm %s3, %s431
          %s434 = sshll.u32 %s407, 4
          %s435 = int_to_ptr.vmem [resolvable:$true] %s434
          %437 = dma.vmem_to_hbm [thread:$0]  %s435, 256, %s432, %s404
        $region36: #{tpu_custom_call.1} parent=31 // pred_fallthru
          _
        // Predicated region
        $region37: #{tpu_custom_call.1} parent=31 // pred_check
          %p438 = pneg %p150
        $region38: #{tpu_custom_call.1} parent=31 // pred_check_branch
          %440 = sbr.rel (%p438) target = $region40
        $region39: #{tpu_custom_call.1} parent=31 // pred_region
          _
        $region40: #{tpu_custom_call.1} parent=31 // pred_fallthru
          _
        // Predicated region
        $region41: #{tpu_custom_call.1} parent=31 // pred_check
          %p441 = pneg %p178
        $region42: #{tpu_custom_call.1} parent=31 // pred_check_branch
          %443 = sbr.rel (%p441) target = $region44
        $region43: #{tpu_custom_call.1} parent=31 // pred_region
          _
        $region44: #{tpu_custom_call.1} parent=31 // pred_fallthru
          _
      $region32: #{tpu_custom_call.1} parent=5 // pred_fallthru
        _
      %p444 = scmp.le.s32.totalorder 2, %s15
      // Predicated region
      $region45: #{tpu_custom_call.1} parent=5 // pred_check
        %p445 = pneg %p444
      $region46: #{tpu_custom_call.1} parent=5 // pred_check_branch
        %447 = sbr.rel (%p445) target = $region48
      $region47: #{tpu_custom_call.1} parent=5 // pred_region
        %s448 = ssub.s32 %s15, 2
        // Predicated region
        $region49: #{tpu_custom_call.1} parent=47 // pred_check
          %p449 = pneg %p128
        $region50: #{tpu_custom_call.1} parent=47 // pred_check_branch
          %451 = sbr.rel (%p449) target = $region52
        $region51: #{tpu_custom_call.1} parent=47 // pred_region
          %s452 = sand.u32 %s113, 1
          %s453 = scalar_lea.sflag [#allocation3], %s452
          %s454 = sand.u32 %s113, 1
          %s455 = smul.addr %s454, 16
          %s456 = scalar_lea.vmem [#allocation2], %s455
          %457 = dma.done %s453, 256
        $region52: #{tpu_custom_call.1} parent=47 // pred_fallthru
          _
        // Predicated region
        $region53: #{tpu_custom_call.1} parent=47 // pred_check
          %p458 = pneg %p156
        $region54: #{tpu_custom_call.1} parent=47 // pred_check_branch
          %460 = sbr.rel (%p458) target = $region56
        $region55: #{tpu_custom_call.1} parent=47 // pred_region
          %p461 = scmp.lt.s32.totalorder %s26, 1
          %s462 = scalar_select %p461, %s26, 1
          %p463 = scmp.lt.s32.totalorder %s27, 0
          %s464 = scalar_select %p463, %s27, 0
          %s465 = sadd.s32 %s464, %s462
          %s466 = smul.addr %s465, 8
          %s467 = scalar_lea.vmem %s4, %s466
        $region56: #{tpu_custom_call.1} parent=47 // pred_fallthru
          _
        // Predicated region
        $region57: #{tpu_custom_call.1} parent=47 // pred_check
          %p468 = pneg %p184
        $region58: #{tpu_custom_call.1} parent=47 // pred_check_branch
          %470 = sbr.rel (%p468) target = $region60
        $region59: #{tpu_custom_call.1} parent=47 // pred_region
          %p471 = scmp.lt.s32.totalorder %s26, 1
          %s472 = scalar_select %p471, %s26, 1
          %p473 = scmp.lt.s32.totalorder %s27, 0
          %s474 = scalar_select %p473, %s27, 0
          %s475 = sadd.s32 %s474, %s472
          %s476 = smul.addr %s475, 8
          %s477 = scalar_lea.vmem %s5, %s476
        $region60: #{tpu_custom_call.1} parent=47 // pred_fallthru
          _
      $region48: #{tpu_custom_call.1} parent=5 // pred_fallthru
        _
    $region6: #{tpu_custom_call.1} parent=1 // loop_footer
      %s19 = sadd.s32 1, %s15
    $region7: #{tpu_custom_call.1} parent=1 // loop_footer_branch
      %14 = sbr.rel target = $region3
    $region8: #{tpu_custom_call.1} parent=1 // loop_exit
      _
    %478 = vsyncpa [#allocation3], 1
    %s479 = scalar_lea.sflag [#allocation3], 1
    %480 = vsyncpa %s479, 1

</llo_original>
